<compile_context>
chip_gen: v5e
topology: v5e:2x2
jax: 0.10.0
libtpu: 0.0.40
codegen_flags: <defaults>
</compile_context>

<pallas_src>
import jax
import jax.numpy as jnp
from jax.experimental import pallas as pl
from jax.experimental.pallas import tpu as pltpu

_LANE = 128
_PALLAS_MIN_ELEMS = 262_144  # ~1 MiB f32: below this, XLA fusion beats any kernel launch


def _smooth_l1_math(diffs, sigma2):
    """Shared elementwise math (where-blend form) used by bypass / tail paths."""
    quad = diffs * diffs * (0.5 * sigma2)
    lin = jnp.abs(diffs) - 0.5 / sigma2
    return jnp.where(diffs < 1.0 / sigma2, quad, lin)


def _make_smooth_l1_kernel(half_sigma2, half_inv_sigma2, inv_sigma2):
    """Elementwise smooth-L1 kernel with sigma folded in as vreg immediates."""

    def kernel(d_ref, t_ref, o_ref):
        diffs = d_ref[...] - t_ref[...]
        quad = diffs * diffs * half_sigma2
        lin = jnp.abs(diffs) - half_inv_sigma2
        # NOTE: signed comparison (not |diffs|) to match the PyTorch reference exactly.
        o_ref[...] = jnp.where(diffs < inv_sigma2, quad, lin).astype(o_ref.dtype)

    return kernel


def _device_tiling():
    """(max_tile_rows, min_grid_steps) per TPU generation; conservative fallback."""
    try:
        kind = jax.devices()[0].device_kind.lower()
    except Exception:
        kind = ""
    if "v6" in kind:
        # 4096 x 128 x 4 B = 2 MiB/array/block; 3 arrays x 2 bufs = 12 MiB < 32 MiB scoped.
        return 4096, 1
    if "7" in kind:
        # 4 MiB/array/block (24 MiB buffered < 32 MiB scoped) and >=2 steps to feed both TCs.
        return 8192, 2
    # v5e / unknown: 1 MiB/array/block, 6 MiB buffered << 16 MiB default scoped VMEM.
    return 2048, 1


def modified_smoothed_l1(deltas, targets, sigma, *, min_pallas_elements=_PALLAS_MIN_ELEMS):
    """Elementwise modified smooth-L1 loss (no reduction), matching the PyTorch module."""
    sigma = float(sigma)
    sigma2 = sigma * sigma

    out_shape = jnp.broadcast_shapes(deltas.shape, targets.shape)
    out_dtype = jnp.promote_types(deltas.dtype, targets.dtype)

    n = 1
    for s in out_shape:
        n *= s

    # --- Small-input bypass: let XLA fuse the whole thing (no kernel launch cost). ---
    if n < max(min_pallas_elements, _LANE):
        return _smooth_l1_math(jnp.subtract(deltas, targets), sigma2).astype(out_dtype)

    # --- Pallas path (HBM-bandwidth bound): lane-dense (rows, 128) slab, big tiles. ---
    d = jnp.broadcast_to(deltas, out_shape) if deltas.shape != out_shape else deltas
    t = jnp.broadcast_to(targets, out_shape) if targets.shape != out_shape else targets
    # Casts are no-ops on the hot path (matching dtypes); only the rare mixed-dtype
    # case pays an extra pass, which keeps block layouts simple and correct.
    if d.dtype != out_dtype:
        d = d.astype(out_dtype)
    if t.dtype != out_dtype:
        t = t.astype(out_dtype)

    d_flat = d.reshape(-1)
    t_flat = t.reshape(-1)

    n_main = (n // _LANE) * _LANE
    rem = n - n_main
    rows = n_main // _LANE

    # When n is a multiple of 128 (the common case) these slices/reshapes are free.
    d2 = d_flat[:n_main].reshape(rows, _LANE)
    t2 = t_flat[:n_main].reshape(rows, _LANE)

    max_tile_rows, min_steps = _device_tiling()
    if rows <= max_tile_rows and min_steps == 1:
        # Single full-extent block: no (8, 128) divisibility constraint, trivial grid.
        tile_rows = rows
    else:
        # Cap the tile so the grid has >= min_steps steps (keeps both v7x TensorCores
        # busy) and round to a sublane multiple of 8 for the (8, 128) block constraint.
        tile_rows = min(max_tile_rows, -(-rows // min_steps))
        tile_rows = max(8, (tile_rows // 8) * 8)
        if tile_rows >= rows:
            tile_rows = rows  # degenerate small case: one full block
    grid = (pl.cdiv(rows, tile_rows),)

    kernel = _make_smooth_l1_kernel(0.5 * sigma2, 0.5 / sigma2, 1.0 / sigma2)

    out2 = pl.pallas_call(
        kernel,
        out_shape=jax.ShapeDtypeStruct((rows, _LANE), out_dtype),
        grid_spec=pl.GridSpec(
            grid=grid,
            in_specs=[
                pl.BlockSpec((tile_rows, _LANE), lambda i: (i, 0)),
                pl.BlockSpec((tile_rows, _LANE), lambda i: (i, 0)),
            ],
            out_specs=pl.BlockSpec((tile_rows, _LANE), lambda i: (i, 0)),
        ),
        # Default double buffering is kept on purpose: the kernel is DMA-bound and
        # spare VMEM is better spent on bigger blocks than deeper pipelining.
        compiler_params=pltpu.CompilerParams(dimension_semantics=("parallel",)),
    )(d2, t2)

    out_flat = out2.reshape(-1)
    if rem:
        # < 128-element tail handled outside the kernel (avoids a full jnp.pad pass).
        tail = _smooth_l1_math(d_flat[n_main:] - t_flat[n_main:], sigma2).astype(out_dtype)
        out_flat = jnp.concatenate([out_flat, tail])

    # TODO(synk): if the caller always reduces (sum/mean), add a fused-reduction
    # variant that accumulates per-block partial sums and skips the elementwise write.
    return out_flat.reshape(out_shape)


def _reference(deltas, targets, sigma):
    """Literal translation of the PyTorch forward (blend form) for validation."""
    sigma2 = sigma * sigma
    diffs = deltas - targets
    option1 = diffs * diffs * 0.5 * sigma2
    option2 = jnp.abs(diffs) - 0.5 / sigma2
    cond = (diffs < 1.0 / sigma2).astype(diffs.dtype)
    return option1 * cond + option2 * (1.0 - cond)


if __name__ == "__main__":
    key = jax.random.PRNGKey(0)
    k1, k2 = jax.random.split(key)

    # Small shapes consistent with a detection-regression loss input (NCHW-like).
    shape = (2, 4, 16, 16)
    deltas = jax.random.normal(k1, shape, dtype=jnp.float32) * 2.0
    targets = jax.random.normal(k2, shape, dtype=jnp.float32) * 2.0
    sigma = 3.0  # module __init__ argument

    # 1) Default wrapper path: this tiny input takes the XLA bypass (the fast choice).
    out_bypass = jax.block_until_ready(modified_smoothed_l1(deltas, targets, sigma))

    # 2) Force the Pallas path so the kernel itself is compiled, run and validated.
    out_pallas = jax.block_until_ready(
        modified_smoothed_l1(deltas, targets, sigma, min_pallas_elements=0))

    ref = _reference(deltas, targets, sigma)
    for out in (out_bypass, out_pallas):
        assert out.shape == ref.shape and out.dtype == ref.dtype
        assert jnp.allclose(out, ref, atol=1e-5, rtol=1e-5), "mismatch vs reference"

    print("KERNEL_OK")
</pallas_src>

<mosaic_0001>
module attributes {stable_mosaic.version = 11 : i64} {
  func.func @kernel(%arg0: i32, %arg1: memref<16x128xf32, #tpu.memory_space<vmem>>, %arg2: memref<16x128xf32, #tpu.memory_space<vmem>>, %arg3: memref<16x128xf32, #tpu.memory_space<vmem>>) attributes {dimension_semantics = [#tpu.dimension_semantics<parallel>], iteration_bounds = array<i64: 1>, scalar_prefetch = 0 : i64, scratch_operands = 0 : i64, tpu.core_type = #tpu.core_type<tc>, window_params = [{transform_indices = @transform_0, window_bounds = array<i64: 16, 128>}, {transform_indices = @transform_1, window_bounds = array<i64: 16, 128>}, {transform_indices = @transform_2, window_bounds = array<i64: 16, 128>}]} {
    %c0 = arith.constant 0 : index
    %c0_0 = arith.constant 0 : index
    %0 = vector.load %arg1[%c0, %c0_0] : memref<16x128xf32, #tpu.memory_space<vmem>>, vector<16x128xf32>
    %c0_1 = arith.constant 0 : index
    %c0_2 = arith.constant 0 : index
    %1 = vector.load %arg2[%c0_1, %c0_2] : memref<16x128xf32, #tpu.memory_space<vmem>>, vector<16x128xf32>
    %2 = arith.subf %0, %1 : vector<16x128xf32>
    %3 = arith.mulf %2, %2 : vector<16x128xf32>
    %cst = arith.constant 4.500000e+00 : f32
    %4 = vector.broadcast %cst : f32 to vector<16x128xf32>
    %5 = arith.mulf %3, %4 : vector<16x128xf32>
    %6 = math.absf %2 : vector<16x128xf32>
    %cst_3 = arith.constant 0.055555556 : f32
    %7 = vector.broadcast %cst_3 : f32 to vector<16x128xf32>
    %8 = arith.subf %6, %7 : vector<16x128xf32>
    %cst_4 = arith.constant 0.111111112 : f32
    %9 = vector.broadcast %cst_4 : f32 to vector<16x128xf32>
    %10 = arith.cmpf olt, %2, %9 : vector<16x128xf32>
    %11 = arith.select %10, %5, %8 : vector<16x128xi1>, vector<16x128xf32>
    %c0_5 = arith.constant 0 : index
    %c0_6 = arith.constant 0 : index
    %12 = vector.load %arg3[%c0_5, %c0_6] : memref<16x128xf32, #tpu.memory_space<vmem>>, vector<16x128xf32>
    tpu.vector_store %arg3[%c0_5, %c0_6], %11 {strides = array<i32>} : memref<16x128xf32, #tpu.memory_space<vmem>>, vector<16x128xf32>,
    return
  }
  func.func @transform_0(%arg0: i32) -> (i32, i32) {
    %c0_i32 = arith.constant 0 : i32
    %c0_i32_0 = arith.constant 0 : i32
    return %arg0, %c0_i32 : i32, i32
  }
  func.func @transform_1(%arg0: i32) -> (i32, i32) {
    %c0_i32 = arith.constant 0 : i32
    %c0_i32_0 = arith.constant 0 : i32
    return %arg0, %c0_i32 : i32, i32
  }
  func.func @transform_2(%arg0: i32) -> (i32, i32) {
    %c0_i32 = arith.constant 0 : i32
    %c0_i32_0 = arith.constant 0 : i32
    return %arg0, %c0_i32 : i32, i32
  }
}

</mosaic_0001>

<llo_original>
// kernel: tpu_custom_call.1
$region0: #{tpu_custom_call.1}
  #allocation0 [shape = 'u32[]', space=smem, size = 0x4, offset = 0x4, fixed_abs, tag = 'smem constant byte address 0x4 - core index']
  #allocation1 [shape = 'u32[72,128]{1,0:T(1,128)}', space=vmem, size = 0x9000, scoped, tag = 'internal scratch']
  %s0 = inlined_call_operand.hbm [shape: f32[16,128], index: 0, kind: input, shape index: {}]
  %s1 = inlined_call_operand.hbm [shape: f32[16,128], index: 1, kind: input, shape index: {}]
  %s2 = inlined_call_operand.hbm [shape: f32[16,128], index: 2, kind: output, shape index: {}]
  %s3 = sld [smem:[#allocation0]]
  $region26: #{tpu_custom_call.1} parent=0
    _
  %s5 = ssub.s32 1, %s3
  %s6 = scalar_select 0, %s5, %s3
  $region1: #{tpu_custom_call.1} parent=0
    #allocation2 [shape = 'u8[8192]{0}', space=vmem, size = 0x2000, scoped, tag = 'input window, operand 0, single buffered']
    #allocation3 [shape = 's32[1]{0}', space=sflag, size = 0x4, scoped, tag = 'scoped memory for tpu_custom_call.1']
    #allocation4 [shape = 's32[1]{0}', space=sflag, size = 0x4, scoped, tag = 'scoped memory for tpu_custom_call.1']
    #allocation5 [shape = 'u8[8192]{0}', space=vmem, size = 0x2000, scoped, tag = 'input window, operand 1, single buffered']
    #allocation6 [shape = 's32[1]{0}', space=sflag, size = 0x4, scoped, tag = 'scoped memory for tpu_custom_call.1']
    #allocation7 [shape = 'u8[8192]{0}', space=vmem, size = 0x2000, scoped, tag = 'output window, operand 0, single buffered']
    %7 = vsyncpa [#allocation3], 0
    %8 = vsyncpa [#allocation6], 0
    %9 = vsyncpa [#allocation4], 0
    // Predicated region
    $region2: #{tpu_custom_call.1} parent=1 // pred_check
      _
    $region3: #{tpu_custom_call.1} parent=1 // pred_check_branch
      %11 = sbr.rel (0) target = $region5
    $region4: #{tpu_custom_call.1} parent=1 // pred_region
      %13 = vsyncadd [#allocation3], 0
      %s14 = sshll.u32 %s0, 4
      %s15 = int_to_ptr.hbm [resolvable:$true] %s14
      %s16 = sshll.u32 [#allocation2], 4
      %s17 = int_to_ptr.vmem [resolvable:$true] %s16
      %22 = dma.hbm_to_vmem [thread:$0]  %s15, 256, %s17, [#allocation3], 128, 128, 8
    $region5: #{tpu_custom_call.1} parent=1 // pred_fallthru
      _
    // Predicated region
    $region6: #{tpu_custom_call.1} parent=1 // pred_check
      _
    $region7: #{tpu_custom_call.1} parent=1 // pred_check_branch
      %24 = sbr.rel (0) target = $region9
    $region8: #{tpu_custom_call.1} parent=1 // pred_region
      %26 = vsyncadd [#allocation6], 0
      %s27 = sshll.u32 %s1, 4
      %s28 = int_to_ptr.hbm [resolvable:$true] %s27
      %s29 = sshll.u32 [#allocation5], 4
      %s30 = int_to_ptr.vmem [resolvable:$true] %s29
      %35 = dma.hbm_to_vmem [thread:$0]  %s28, 256, %s30, [#allocation6], 128, 128, 8
    $region9: #{tpu_custom_call.1} parent=1 // pred_fallthru
      _
    // Predicated region
    $region10: #{tpu_custom_call.1} parent=1 // pred_check
      _
    $region11: #{tpu_custom_call.1} parent=1 // pred_check_branch
      %37 = sbr.rel (0) target = $region13
    $region12: #{tpu_custom_call.1} parent=1 // pred_region
      %39 = dma.done [#allocation3], 256
    $region13: #{tpu_custom_call.1} parent=1 // pred_fallthru
      _
    // Predicated region
    $region14: #{tpu_custom_call.1} parent=1 // pred_check
      _
    $region15: #{tpu_custom_call.1} parent=1 // pred_check_branch
      %41 = sbr.rel (0) target = $region17
    $region16: #{tpu_custom_call.1} parent=1 // pred_region
      %43 = dma.done [#allocation6], 256
    $region17: #{tpu_custom_call.1} parent=1 // pred_fallthru
      _
    %v44 = vld [vmem:[#allocation2] sm:$0xff]
    %v45 = vld [vmem:[#allocation2 + $0x8] sm:$0xff]
    %v46 = vld [vmem:[#allocation5] sm:$0xff]
    %v47 = vld [vmem:[#allocation5 + $0x8] sm:$0xff]
    %v48 = vsub.f32 %v44, %v46
    %v49 = vsub.f32 %v45, %v47
    %v50 = vmul.f32 %v48, %v48
    %v51 = vmul.f32 %v49, %v49
    %v52 = vmul.f32 %v50, 4.5
    %v53 = vmul.f32 %v51, 4.5
    %v54 = vand.u32 2147483647, %v48
    %v55 = vand.u32 2147483647, %v49
    %v56 = vsub.f32 %v54, 0.055555556
    %v57 = vsub.f32 %v55, 0.055555556
    %vm58 = vcmp.lt.f32.partialorder %v48, 0.11111111
    %vm59 = vcmp.lt.f32.partialorder %v49, 0.11111111
    %v60 = vsel %vm58, %v52, %v56
    %v61 = vsel %vm59, %v53, %v57
    %62 = vst [vmem:[#allocation7] sm:$0xff] %v60
    %63 = vst [vmem:[#allocation7 + $0x8] sm:$0xff] %v61
    // Predicated region
    $region18: #{tpu_custom_call.1} parent=1 // pred_check
      _
    $region19: #{tpu_custom_call.1} parent=1 // pred_check_branch
      %65 = sbr.rel (0) target = $region21
    $region20: #{tpu_custom_call.1} parent=1 // pred_region
      %67 = vsyncadd [#allocation4], 0
      %s68 = sshll.u32 [#allocation7], 4
      %s69 = int_to_ptr.vmem [resolvable:$true] %s68
      %s70 = sshll.u32 %s2, 4
      %s71 = int_to_ptr.hbm [resolvable:$true] %s70
      %76 = dma.vmem_to_hbm [thread:$0]  %s69, 256, %s71, [#allocation4], 128, 128, 8
    $region21: #{tpu_custom_call.1} parent=1 // pred_fallthru
      _
    // Predicated region
    $region22: #{tpu_custom_call.1} parent=1 // pred_check
      _
    $region23: #{tpu_custom_call.1} parent=1 // pred_check_branch
      %78 = sbr.rel (0) target = $region25
    $region24: #{tpu_custom_call.1} parent=1 // pred_region
      %80 = dma.done [#allocation4], 256
    $region25: #{tpu_custom_call.1} parent=1 // pred_fallthru
      _
    %81 = vsyncpa [#allocation3], 1
    %82 = vsyncpa [#allocation6], 1
    %83 = vsyncpa [#allocation4], 1

</llo_original>
